<compile_context>
chip_gen: v5e
topology: v5e:2x2
jax: 0.10.0
libtpu: 0.0.40
codegen_flags: <defaults>
</compile_context>

<pallas_src>
import functools

import jax
import jax.numpy as jnp
from jax import lax
from jax.experimental import pallas as pl
from jax.experimental.pallas import tpu as pltpu


# ----------------------------- Pallas kernel -----------------------------

def stem_kernel(xb_ref, xh_ref, w_ref, b_ref, o_ref, xt_ref, *, th, wo, cin, cout):
    """One (batch, row-tile) step of Conv3x3/s2 + folded-BN + ReLU.

    xb_ref: [th, Wo+1, 4*Cin]    body row-pairs j*th .. j*th+th-1
    xh_ref: [1,  Wo+1, 4*Cin]    halo row-pair  j*th+th
    w_ref : [4, Cout, 4*Cin]     per-slab folded weights (zeros where tap unused)
    b_ref : [Cout, 1]            folded BN shift
    o_ref : [Cout, th*Wo]        output block (channels on sublanes, spatial on lanes)
    xt_ref: [th+1, Wo+1, 4*Cin]  VMEM scratch: body + halo stitched together
    """
    # Stitch body + halo into one VMEM tile (only cross-ref operation needed).
    xt_ref[0:th] = xb_ref[...]
    xt_ref[th:th + 1] = xh_ref[...]

    m = th * wo
    k = 4 * cin
    acc = None
    # Four contiguous (row-pair offset dr, col-pair offset dc) slabs cover all
    # nine 3x3 taps; slabs are re-read from the scratch ref per dot to keep
    # live ranges short.
    for s, (dr, dc) in enumerate(((0, 0), (0, 1), (1, 0), (1, 1))):
        slab = xt_ref[dr:dr + th, dc:dc + wo, :].reshape(m, k)     # [m, 4*Cin]
        part = lax.dot_general(
            w_ref[s], slab, (((1,), (1,)), ((), ())),
            preferred_element_type=jnp.float32)                    # [Cout, m]
        acc = part if acc is None else acc + part
    # Folded-BN shift + ReLU, lane-dense(ish) transposed store.
    o_ref[...] = jnp.maximum(acc + b_ref[...], 0.0).astype(o_ref.dtype)


# ----------------------------- wrapper helpers -----------------------------

def _round_up(x, m):
    return -(-x // m) * m


def _vmem_limit_bytes():
    """Generation-aware scoped-VMEM request (v7x: 64 MiB physical -> 32 MiB)."""
    try:
        cap = int(pltpu.get_tpu_info().vmem_capacity_bytes)
    except Exception:
        cap = 64 << 20                      # conservative fallback (v7x-sized)
    return int(min(cap // 2, 64 << 20))


def _pick_block_rows(ho, wo, cin, cout, requested, budget):
    """Largest divisor of Ho whose double-buffered, (8,128)-PADDED tile
    footprint fits `budget`.  Restricted to th == Ho or th*Wo % 128 == 0 so the
    output block stays lane-aligned."""
    lanes_x = _round_up(4 * cin, 128)       # lane padding of the 4*Cin minor dim
    sub_x = _round_up(wo + 1, 8)

    def tile_bytes(th):
        body = th * sub_x * lanes_x * 4
        halo = 1 * sub_x * lanes_x * 4
        scratch = (th + 1) * sub_x * lanes_x * 4
        outb = _round_up(cout, 8) * _round_up(th * wo, 128) * 4
        wgt = 4 * _round_up(cout, 8) * _round_up(4 * cin, 128) * 4
        bias = _round_up(cout, 8) * 128 * 4
        return 2 * (body + halo + wgt + bias) + 2 * outb + scratch

    cands = [d for d in range(ho, 0, -1)
             if ho % d == 0 and (d == ho or (d * wo) % 128 == 0)]
    if requested is not None and requested in cands:
        return int(requested)
    for d in cands:
        if tile_bytes(d) <= budget:
            return d
    return cands[-1]


# ----------------------------- forward -----------------------------

def stem_forward(x_nchw, w_oihw, gamma, beta, mean, var, *, eps=1e-5, block_rows=None):
    """Stem.forward: Conv2d(in_c,out_c,3,stride=2,pad=1,bias=False) -> BN(eval) -> ReLU."""
    n, cin, h, w = x_nchw.shape
    cout = w_oihw.shape[0]
    ho = (h + 2 - 3) // 2 + 1
    wo = (w + 2 - 3) // 2 + 1

    # ---- fold eval-mode BN into conv weight / bias (wrapper time) ----
    scale = gamma * lax.rsqrt(var + eps)                        # [Cout]
    wf = jnp.transpose(w_oihw, (2, 3, 1, 0)) * scale            # [3,3,Cin,Cout] (ky,kx,ci,co)
    wf4 = jnp.pad(wf, ((0, 1), (0, 1), (0, 0), (0, 0)))         # zero taps ky=3 / kx=3
    w6 = wf4.reshape(2, 2, 2, 2, cin, cout)                     # (dr,a,dc,b,ci,co)
    w4 = jnp.transpose(w6, (0, 2, 5, 1, 3, 4)).reshape(4, cout, 4 * cin)
    b2 = (beta - mean * scale).reshape(cout, 1)

    # ---- fold BOTH stride-2 parities into the minor dim:
    # x7[n, rp, cp, a*2Cin + b*Cin + ci] = xpad[n, 2rp+a, 2cp+b, ci] ----
    hp, wp = 2 * (ho + 1), 2 * (wo + 1)
    x_nhwc = jnp.transpose(x_nchw, (0, 2, 3, 1))
    xp = jnp.pad(x_nhwc, ((0, 0), (1, hp - 1 - h), (1, wp - 1 - w), (0, 0)))
    x7 = xp.reshape(n, ho + 1, 2, wo + 1, 2, cin)
    x7 = jnp.transpose(x7, (0, 1, 3, 2, 4, 5)).reshape(n, ho + 1, wo + 1, 4 * cin)

    vmem_limit = _vmem_limit_bytes()
    th = _pick_block_rows(ho, wo, cin, cout, block_rows, vmem_limit // 2)
    nt = ho // th
    # NOTE: th*Wo reshape in-kernel assumes Wo is a multiple of 8 or small;
    # holds for typical stems (and for the toy shapes below).

    out = pl.pallas_call(
        functools.partial(stem_kernel, th=th, wo=wo, cin=cin, cout=cout),
        out_shape=jax.ShapeDtypeStruct((n, cout, ho * wo), jnp.float32),
        grid_spec=pltpu.PrefetchScalarGridSpec(
            num_scalar_prefetch=0,
            grid=(n, nt),
            in_specs=[
                # body: th non-overlapping row-pairs of x7
                pl.BlockSpec((None, th, wo + 1, 4 * cin),
                             lambda i, j: (i, j, 0, 0)),
                # halo: single row-pair j*th + th of the SAME array (no dup in HBM)
                pl.BlockSpec((None, 1, wo + 1, 4 * cin),
                             lambda i, j: (i, j * th + th, 0, 0)),
                pl.BlockSpec((4, cout, 4 * cin), lambda i, j: (0, 0, 0)),
                pl.BlockSpec((cout, 1), lambda i, j: (0, 0)),
            ],
            out_specs=pl.BlockSpec((None, cout, th * wo),
                                   lambda i, j: (i, 0, j)),
            scratch_shapes=[pltpu.VMEM((th + 1, wo + 1, 4 * cin), jnp.float32)],
        ),
        compiler_params=pltpu.CompilerParams(
            dimension_semantics=("parallel", "parallel"),
            vmem_limit_bytes=vmem_limit),
    )(x7, x7, w4, b2)

    # Already channel-major: metadata-only reshape to NCHW, no transpose.
    return out.reshape(n, cout, ho, wo)


# ----------------------------- reference (pure JAX) -----------------------------

def reference_forward(x, w, gamma, beta, mean, var, eps=1e-5):
    y = lax.conv_general_dilated(
        x, w, (2, 2), [(1, 1), (1, 1)],
        dimension_numbers=("NCHW", "OIHW", "NCHW"))
    rs = lambda v: v.reshape(1, -1, 1, 1)
    y = (y - rs(mean)) * lax.rsqrt(rs(var) + eps) * rs(gamma) + rs(beta)
    return jnp.maximum(y, 0.0)


# ----------------------------- main -----------------------------

if __name__ == "__main__":
    N, H, W = 2, 16, 16
    in_c, out_c = 4, 32          # Stem(in_c=4, out_c=32), fast_downsample=False

    key = jax.random.PRNGKey(0)
    kw, kx = jax.random.split(key, 2)
    w_t = 0.1 * jax.random.normal(kw, (out_c, in_c, 3, 3), jnp.float32)  # OIHW
    x = jax.random.normal(kx, (N, in_c, H, W), jnp.float32)

    # Deterministic BatchNorm (eval-mode) parameters.
    cidx = jnp.arange(out_c, dtype=jnp.float32)
    gamma = 1.0 + 0.01 * cidx
    beta = 0.02 * cidx - 0.1
    mean = 0.03 * (cidx % 5.0)
    var = 1.0 + 0.05 * (cidx % 7.0)

    out = stem_forward(x, w_t, gamma, beta, mean, var)
    out = jax.block_until_ready(out)

    ref = reference_forward(x, w_t, gamma, beta, mean, var)
    err = float(jnp.max(jnp.abs(out - ref)))
    assert out.shape == (N, out_c, H // 2, W // 2), out.shape
    assert err < 1e-3, f"max abs error {err}"
    print("KERNEL_OK")
</pallas_src>

<mosaic_0001>
module attributes {stable_mosaic.version = 11 : i64} {
  func.func @stem_kernel(%arg0: i32, %arg1: i32, %arg2: memref<1x8x9x16xf32, #tpu.memory_space<vmem>>, %arg3: memref<1x1x9x16xf32, #tpu.memory_space<vmem>>, %arg4: memref<4x32x16xf32, #tpu.memory_space<vmem>>, %arg5: memref<32x1xf32, #tpu.memory_space<vmem>>, %arg6: memref<1x32x64xf32, #tpu.memory_space<vmem>>, %arg7: memref<9x9x16xf32, #tpu.memory_space<vmem>>) attributes {dimension_semantics = [#tpu.dimension_semantics<parallel>, #tpu.dimension_semantics<parallel>], iteration_bounds = array<i64: 2, 1>, scalar_prefetch = 0 : i64, scratch_operands = 1 : i64, tpu.core_type = #tpu.core_type<tc>, window_params = [{transform_indices = @transform_0, window_bounds = array<i64: 1, 8, 9, 16>}, {transform_indices = @transform_1, window_bounds = array<i64: 1, 1, 9, 16>}, {pipeline_mode = #tpu.pipeline_mode<synchronous>, transform_indices = @transform_2, window_bounds = array<i64: 4, 32, 16>}, {pipeline_mode = #tpu.pipeline_mode<synchronous>, transform_indices = @transform_3, window_bounds = array<i64: 32, 1>}, {transform_indices = @transform_4, window_bounds = array<i64: 1, 32, 64>}]} {
    %c0 = arith.constant 0 : index
    %c0_0 = arith.constant 0 : index
    %c0_1 = arith.constant 0 : index
    %c0_2 = arith.constant 0 : index
    %0 = vector.load %arg2[%c0, %c0_0, %c0_1, %c0_2] : memref<1x8x9x16xf32, #tpu.memory_space<vmem>>, vector<1x8x9x16xf32>
    %1 = vector.shape_cast %0 : vector<1x8x9x16xf32> to vector<8x9x16xf32>
    %c0_3 = arith.constant 0 : index
    %c0_4 = arith.constant 0 : index
    %c0_5 = arith.constant 0 : index
    %2 = vector.load %arg7[%c0_3, %c0_4, %c0_5] : memref<9x9x16xf32, #tpu.memory_space<vmem>>, vector<8x9x16xf32>
    tpu.vector_store %arg7[%c0_3, %c0_4, %c0_5], %1 {strides = array<i32>} : memref<9x9x16xf32, #tpu.memory_space<vmem>>, vector<8x9x16xf32>,
    %c0_6 = arith.constant 0 : index
    %c0_7 = arith.constant 0 : index
    %c0_8 = arith.constant 0 : index
    %c0_9 = arith.constant 0 : index
    %3 = vector.load %arg3[%c0_6, %c0_7, %c0_8, %c0_9] : memref<1x1x9x16xf32, #tpu.memory_space<vmem>>, vector<1x1x9x16xf32>
    %4 = vector.shape_cast %3 : vector<1x1x9x16xf32> to vector<1x9x16xf32>
    %c8 = arith.constant 8 : index
    %c0_10 = arith.constant 0 : index
    %c0_11 = arith.constant 0 : index
    %5 = vector.load %arg7[%c8, %c0_10, %c0_11] : memref<9x9x16xf32, #tpu.memory_space<vmem>>, vector<1x9x16xf32>
    tpu.vector_store %arg7[%c8, %c0_10, %c0_11], %4 {strides = array<i32>} : memref<9x9x16xf32, #tpu.memory_space<vmem>>, vector<1x9x16xf32>,
    %c0_12 = arith.constant 0 : index
    %c0_13 = arith.constant 0 : index
    %c0_14 = arith.constant 0 : index
    %6 = vector.load %arg7[%c0_12, %c0_13, %c0_14] : memref<9x9x16xf32, #tpu.memory_space<vmem>>, vector<8x8x16xf32>
    %7 = vector.shape_cast %6 : vector<8x8x16xf32> to vector<64x16xf32>
    %c0_15 = arith.constant 0 : index
    %c0_16 = arith.constant 0 : index
    %c0_17 = arith.constant 0 : index
    %8 = vector.load %arg4[%c0_15, %c0_16, %c0_17] : memref<4x32x16xf32, #tpu.memory_space<vmem>>, vector<1x32x16xf32>
    %9 = vector.shape_cast %8 : vector<1x32x16xf32> to vector<32x16xf32>
    %cst = arith.constant dense<0.000000e+00> : vector<32x64xf32>
    %10 = tpu.matmul %9, %7, %cst {dimension_numbers = #tpu.dot_dimension_numbers<[1], [1], [0], [0], [0, 0, 1, 0], [], []>} : vector<32x16xf32>, vector<64x16xf32>, vector<32x64xf32> -> vector<32x64xf32>
    %c0_18 = arith.constant 0 : index
    %c1 = arith.constant 1 : index
    %c0_19 = arith.constant 0 : index
    %11 = vector.load %arg7[%c0_18, %c1, %c0_19] : memref<9x9x16xf32, #tpu.memory_space<vmem>>, vector<8x8x16xf32>
    %12 = vector.shape_cast %11 : vector<8x8x16xf32> to vector<64x16xf32>
    %c1_20 = arith.constant 1 : index
    %c0_21 = arith.constant 0 : index
    %c0_22 = arith.constant 0 : index
    %13 = vector.load %arg4[%c1_20, %c0_21, %c0_22] : memref<4x32x16xf32, #tpu.memory_space<vmem>>, vector<1x32x16xf32>
    %14 = vector.shape_cast %13 : vector<1x32x16xf32> to vector<32x16xf32>
    %cst_23 = arith.constant dense<0.000000e+00> : vector<32x64xf32>
    %15 = tpu.matmul %14, %12, %cst_23 {dimension_numbers = #tpu.dot_dimension_numbers<[1], [1], [0], [0], [0, 0, 1, 0], [], []>} : vector<32x16xf32>, vector<64x16xf32>, vector<32x64xf32> -> vector<32x64xf32>
    %16 = arith.addf %10, %15 : vector<32x64xf32>
    %c1_24 = arith.constant 1 : index
    %c0_25 = arith.constant 0 : index
    %c0_26 = arith.constant 0 : index
    %17 = vector.load %arg7[%c1_24, %c0_25, %c0_26] : memref<9x9x16xf32, #tpu.memory_space<vmem>>, vector<8x8x16xf32>
    %18 = vector.shape_cast %17 : vector<8x8x16xf32> to vector<64x16xf32>
    %c2 = arith.constant 2 : index
    %c0_27 = arith.constant 0 : index
    %c0_28 = arith.constant 0 : index
    %19 = vector.load %arg4[%c2, %c0_27, %c0_28] : memref<4x32x16xf32, #tpu.memory_space<vmem>>, vector<1x32x16xf32>
    %20 = vector.shape_cast %19 : vector<1x32x16xf32> to vector<32x16xf32>
    %cst_29 = arith.constant dense<0.000000e+00> : vector<32x64xf32>
    %21 = tpu.matmul %20, %18, %cst_29 {dimension_numbers = #tpu.dot_dimension_numbers<[1], [1], [0], [0], [0, 0, 1, 0], [], []>} : vector<32x16xf32>, vector<64x16xf32>, vector<32x64xf32> -> vector<32x64xf32>
    %22 = arith.addf %16, %21 : vector<32x64xf32>
    %c1_30 = arith.constant 1 : index
    %c1_31 = arith.constant 1 : index
    %c0_32 = arith.constant 0 : index
    %23 = vector.load %arg7[%c1_30, %c1_31, %c0_32] : memref<9x9x16xf32, #tpu.memory_space<vmem>>, vector<8x8x16xf32>
    %24 = vector.shape_cast %23 : vector<8x8x16xf32> to vector<64x16xf32>
    %c3 = arith.constant 3 : index
    %c0_33 = arith.constant 0 : index
    %c0_34 = arith.constant 0 : index
    %25 = vector.load %arg4[%c3, %c0_33, %c0_34] : memref<4x32x16xf32, #tpu.memory_space<vmem>>, vector<1x32x16xf32>
    %26 = vector.shape_cast %25 : vector<1x32x16xf32> to vector<32x16xf32>
    %cst_35 = arith.constant dense<0.000000e+00> : vector<32x64xf32>
    %27 = tpu.matmul %26, %24, %cst_35 {dimension_numbers = #tpu.dot_dimension_numbers<[1], [1], [0], [0], [0, 0, 1, 0], [], []>} : vector<32x16xf32>, vector<64x16xf32>, vector<32x64xf32> -> vector<32x64xf32>
    %28 = arith.addf %22, %27 : vector<32x64xf32>
    %c0_36 = arith.constant 0 : index
    %c0_37 = arith.constant 0 : index
    %29 = vector.load %arg5[%c0_36, %c0_37] : memref<32x1xf32, #tpu.memory_space<vmem>>, vector<32x1xf32>
    %30 = vector.broadcast %29 : vector<32x1xf32> to vector<32x64xf32>
    %31 = arith.addf %28, %30 : vector<32x64xf32>
    %cst_38 = arith.constant 0.000000e+00 : f32
    %32 = vector.broadcast %cst_38 : f32 to vector<32x64xf32>
    %33 = arith.maximumf %31, %32 : vector<32x64xf32>
    %c0_39 = arith.constant 0 : index
    %c0_40 = arith.constant 0 : index
    %c0_41 = arith.constant 0 : index
    %34 = vector.load %arg6[%c0_39, %c0_40, %c0_41] : memref<1x32x64xf32, #tpu.memory_space<vmem>>, vector<1x32x64xf32>
    %35 = vector.shape_cast %34 : vector<1x32x64xf32> to vector<32x64xf32>
    %36 = vector.shape_cast %33 : vector<32x64xf32> to vector<1x32x64xf32>
    tpu.vector_store %arg6[%c0_39, %c0_40, %c0_41], %36 {strides = array<i32>} : memref<1x32x64xf32, #tpu.memory_space<vmem>>, vector<1x32x64xf32>,
    return
  }
  func.func @transform_0(%arg0: i32, %arg1: i32) -> (i32, i32, i32, i32) {
    %c0_i32 = arith.constant 0 : i32
    %c0_i32_0 = arith.constant 0 : i32
    %c0_i32_1 = arith.constant 0 : i32
    return %arg0, %arg1, %c0_i32, %c0_i32_0 : i32, i32, i32, i32
  }
  func.func @transform_1(%arg0: i32, %arg1: i32) -> (i32, i32, i32, i32) {
    %c8_i32 = arith.constant 8 : i32
    %0 = arith.muli %arg1, %c8_i32 : i32
    %c8_i32_0 = arith.constant 8 : i32
    %1 = arith.addi %0, %c8_i32_0 : i32
    %c0_i32 = arith.constant 0 : i32
    %c0_i32_1 = arith.constant 0 : i32
    %c0_i32_2 = arith.constant 0 : i32
    return %arg0, %1, %c0_i32, %c0_i32_1 : i32, i32, i32, i32
  }
  func.func @transform_2(%arg0: i32, %arg1: i32) -> (i32, i32, i32) {
    %c0_i32 = arith.constant 0 : i32
    %c0_i32_0 = arith.constant 0 : i32
    %c0_i32_1 = arith.constant 0 : i32
    %c0_i32_2 = arith.constant 0 : i32
    return %c0_i32, %c0_i32_0, %c0_i32_1 : i32, i32, i32
  }
  func.func @transform_3(%arg0: i32, %arg1: i32) -> (i32, i32) {
    %c0_i32 = arith.constant 0 : i32
    %c0_i32_0 = arith.constant 0 : i32
    %c0_i32_1 = arith.constant 0 : i32
    return %c0_i32, %c0_i32_0 : i32, i32
  }
  func.func @transform_4(%arg0: i32, %arg1: i32) -> (i32, i32, i32) {
    %c0_i32 = arith.constant 0 : i32
    %c0_i32_0 = arith.constant 0 : i32
    return %arg0, %c0_i32, %arg1 : i32, i32, i32
  }
}

</mosaic_0001>

<llo_original>
// kernel: tpu_custom_call.1
$region0: #{tpu_custom_call.1}
  #allocation0 [shape = 'u32[]', space=smem, size = 0x4, offset = 0x4, fixed_abs, tag = 'smem constant byte address 0x4 - core index']
  #allocation1 [shape = 'u32[72,128]{1,0:T(1,128)}', space=vmem, size = 0x9000, scoped, tag = 'internal scratch']
  #allocation2 [shape = 'f32[9,9,16]{2,1,0:T(8,128)}', space=vmem, size = 0x12000, scoped, tag = 'scratch operand']
  %s0 = inlined_call_operand.vmem [shape: f32[2,9,9,16], index: 0, kind: input, shape index: {}]
  %s1 = inlined_call_operand.vmem [shape: f32[2,9,9,16], index: 1, kind: input, shape index: {}]
  %s2 = inlined_call_operand.vmem [shape: f32[4,32,16], index: 2, kind: input, shape index: {}]
  %s3 = inlined_call_operand.vmem [shape: f32[32,1], index: 3, kind: input, shape index: {}]
  %s4 = inlined_call_operand.hbm [shape: f32[2,32,64], index: 4, kind: output, shape index: {}]
  %s5 = sld [smem:[#allocation0]]
  $region49: #{tpu_custom_call.1} parent=0
    _
  %s7 = ssub.s32 1, %s5
  %s8 = scalar_select 0, %s7, %s5
  $region1: #{tpu_custom_call.1} parent=0
    #allocation3 [shape = 'u8[32768]{0}', space=vmem, size = 0x8000, scoped, tag = 'output window, operand 0']
    #allocation4 [shape = 's32[2]{0}', space=sflag, size = 0x8, scoped, tag = 'scoped memory for tpu_custom_call.1']
    %9 = vsyncpa [#allocation4], 0
    %s10 = scalar_lea.sflag [#allocation4], 1
    %11 = vsyncpa %s10, 0
    loop: start=0, step=1, limit=4
    $region2: #{tpu_custom_call.1} parent=1 // loop_pre_header
      _
    $region3: #{tpu_custom_call.1} parent=1 // loop_header
      %s13 = sphi 0, %s17
      %p14 = scmp.ge.s32.totalorder %s13, 4
      %s20 = sphi 0, %s32
      %s21 = sphi 0, %s28
      %s22 = sphi 0, %s20
      %s23 = sphi 0, %s21
      %s24 = sphi 0, %s22
      %s25 = sphi 0, %s23
      %s37 = sphi 0, %s39
      %s40 = sphi 0, %s37
      %s41 = sphi 0, %s40
      %s57 = sphi 0, %s41
      %s69 = sphi 0, %s71
      %s72 = sphi 0, %s69
      %s73 = sphi 0, %s72
      %s89 = sphi 0, %s73
      %s93 = sphi 0, %s93
      %s95 = sphi 0, %s93
      %s96 = sphi 0, %s95
      %s110 = sphi 0, %s96
      %s114 = sphi 0, %s114
      %s116 = sphi 0, %s114
      %s117 = sphi 0, %s116
      %s131 = sphi 0, %s117
      %s139 = sphi 0, %s141
      %s142 = sphi 0, %s139
      %s143 = sphi 0, %s142
      %s159 = sphi 0, %s143
    $region4: #{tpu_custom_call.1} parent=1 // loop_header_branch
      %16 = sbr.rel (%p14) target = $region8
    $region5: #{tpu_custom_call.1} parent=1 // loop_body
      %s18 = ssub.s32 %s13, 1
      %s19 = ssub.s32 %s13, 2
      %s26 = sadd.s32 1, %s21
      %p27 = scmp.ge.s32.totalorder %s26, 1
      %s28 = scalar_select %p27, 0, %s26
      %s29 = sadd.s32 1, %s20
      %s30 = scalar_select %p27, %s29, %s20
      %p31 = scmp.ge.s32.totalorder %s30, 2
      %s32 = scalar_select %p31, 0, %s30
      %s33 = ssub.s32 %s20, %s32
      %s34 = ssub.s32 %s21, %s28
      %s35 = sor.u32 %s33, %s34
      %p36 = scmp.eq.s32.totalorder %s35, 0
      %s38 = sadd.s32 %s37, 1
      %s39 = scalar_select %p36, %s37, %s38
      %p42 = pneg %p36
      %p43 = scmp.eq.s32.totalorder %s13, 1
      %p44 = por %p42, %p43
      %p45 = scmp.ne.s32.totalorder %s37, %s40
      %p46 = scmp.eq.s32.totalorder %s13, 0
      %p47 = por %p45, %p46
      %p48 = scmp.ne.s32.totalorder %s37, %s40
      %p49 = scmp.eq.s32.totalorder %s18, 1
      %p50 = por %p48, %p49
      %p51 = scmp.ne.s32.totalorder %s40, %s41
      %p52 = scmp.eq.s32.totalorder %s18, 0
      %p53 = por %p51, %p52
      %p54 = scmp.ne.s32.totalorder %s40, %s41
      %p55 = scmp.eq.s32.totalorder %s19, 1
      %p56 = por %p54, %p55
      %p58 = scmp.ne.s32.totalorder %s41, %s57
      %p59 = scmp.eq.s32.totalorder %s19, 0
      %p60 = por %p58, %p59
      %s61 = smul.u32 %s21, 8
      %s62 = sadd.s32 %s61, 8
      %s63 = smul.u32 %s28, 8
      %s64 = sadd.s32 %s63, 8
      %s65 = ssub.s32 %s20, %s32
      %s66 = ssub.s32 %s62, %s64
      %s67 = sor.u32 %s65, %s66
      %p68 = scmp.eq.s32.totalorder %s67, 0
      %s70 = sadd.s32 %s69, 1
      %s71 = scalar_select %p68, %s69, %s70
      %p74 = pneg %p68
      %p75 = scmp.eq.s32.totalorder %s13, 1
      %p76 = por %p74, %p75
      %p77 = scmp.ne.s32.totalorder %s69, %s72
      %p78 = scmp.eq.s32.totalorder %s13, 0
      %p79 = por %p77, %p78
      %p80 = scmp.ne.s32.totalorder %s69, %s72
      %p81 = scmp.eq.s32.totalorder %s18, 1
      %p82 = por %p80, %p81
      %p83 = scmp.ne.s32.totalorder %s72, %s73
      %p84 = scmp.eq.s32.totalorder %s18, 0
      %p85 = por %p83, %p84
      %p86 = scmp.ne.s32.totalorder %s72, %s73
      %p87 = scmp.eq.s32.totalorder %s19, 1
      %p88 = por %p86, %p87
      %p90 = scmp.ne.s32.totalorder %s73, %s89
      %p91 = scmp.eq.s32.totalorder %s19, 0
      %p92 = por %p90, %p91
      %s94 = sadd.s32 %s93, 1
      %p97 = scmp.eq.s32.totalorder %s13, 1
      %p98 = scmp.ne.s32.totalorder %s93, %s95
      %p99 = scmp.eq.s32.totalorder %s13, 0
      %p100 = por %p98, %p99
      %p101 = scmp.ne.s32.totalorder %s93, %s95
      %p102 = scmp.eq.s32.totalorder %s18, 1
      %p103 = por %p101, %p102
      %p104 = scmp.ne.s32.totalorder %s95, %s96
      %p105 = scmp.eq.s32.totalorder %s18, 0
      %p106 = por %p104, %p105
      %p107 = scmp.ne.s32.totalorder %s95, %s96
      %p108 = scmp.eq.s32.totalorder %s19, 1
      %p109 = por %p107, %p108
      %p111 = scmp.ne.s32.totalorder %s96, %s110
      %p112 = scmp.eq.s32.totalorder %s19, 0
      %p113 = por %p111, %p112
      %s115 = sadd.s32 %s114, 1
      %p118 = scmp.eq.s32.totalorder %s13, 1
      %p119 = scmp.ne.s32.totalorder %s114, %s116
      %p120 = scmp.eq.s32.totalorder %s13, 0
      %p121 = por %p119, %p120
      %p122 = scmp.ne.s32.totalorder %s114, %s116
      %p123 = scmp.eq.s32.totalorder %s18, 1
      %p124 = por %p122, %p123
      %p125 = scmp.ne.s32.totalorder %s116, %s117
      %p126 = scmp.eq.s32.totalorder %s18, 0
      %p127 = por %p125, %p126
      %p128 = scmp.ne.s32.totalorder %s116, %s117
      %p129 = scmp.eq.s32.totalorder %s19, 1
      %p130 = por %p128, %p129
      %p132 = scmp.ne.s32.totalorder %s117, %s131
      %p133 = scmp.eq.s32.totalorder %s19, 0
      %p134 = por %p132, %p133
      %s135 = ssub.s32 %s20, %s32
      %s136 = ssub.s32 %s21, %s28
      %s137 = sor.u32 %s135, %s136
      %p138 = scmp.eq.s32.totalorder %s137, 0
      %s140 = sadd.s32 %s139, 1
      %s141 = scalar_select %p138, %s139, %s140
      %p144 = pneg %p138
      %p145 = scmp.eq.s32.totalorder %s13, 1
      %p146 = por %p144, %p145
      %p147 = scmp.ne.s32.totalorder %s139, %s142
      %p148 = scmp.eq.s32.totalorder %s13, 0
      %p149 = por %p147, %p148
      %p150 = scmp.ne.s32.totalorder %s139, %s142
      %p151 = scmp.eq.s32.totalorder %s18, 1
      %p152 = por %p150, %p151
      %p153 = scmp.ne.s32.totalorder %s142, %s143
      %p154 = scmp.eq.s32.totalorder %s18, 0
      %p155 = por %p153, %p154
      %p156 = scmp.ne.s32.totalorder %s142, %s143
      %p157 = scmp.eq.s32.totalorder %s19, 1
      %p158 = por %p156, %p157
      %p160 = scmp.ne.s32.totalorder %s143, %s159
      %p161 = scmp.eq.s32.totalorder %s19, 0
      %p162 = por %p160, %p161
      %p163 = scmp.le.s32.totalorder 1, %s13
      %p164 = scmp.lt.s32.totalorder %s13, 3
      %p165 = pnand %p163, %p164
      %p166 = pneg %p165
      // Predicated region
      $region9: #{tpu_custom_call.1} parent=5 // pred_check
        _
      $region10: #{tpu_custom_call.1} parent=5 // pred_check_branch
        %168 = sbr.rel (%p165) target = $region12
      $region11: #{tpu_custom_call.1} parent=5 // pred_region
        %s169 = ssub.s32 %s13, 1
        // Predicated region
        $region13: #{tpu_custom_call.1} parent=11 // pred_check
          %p170 = pneg %p106
        $region14: #{tpu_custom_call.1} parent=11 // pred_check_branch
          %172 = sbr.rel (%p170) target = $region16
        $region15: #{tpu_custom_call.1} parent=11 // pred_region
          _
        $region16: #{tpu_custom_call.1} parent=11 // pred_fallthru
          _
        // Predicated region
        $region17: #{tpu_custom_call.1} parent=11 // pred_check
          %p173 = pneg %p127
        $region18: #{tpu_custom_call.1} parent=11 // pred_check_branch
          %175 = sbr.rel (%p173) target = $region20
        $region19: #{tpu_custom_call.1} parent=11 // pred_region
          _
        $region20: #{tpu_custom_call.1} parent=11 // pred_fallthru
          _
      $region12: #{tpu_custom_call.1} parent=5 // pred_fallthru
        _
      %p176 = scmp.lt.s32.totalorder %s13, 2
      // Predicated region
      $region21: #{tpu_custom_call.1} parent=5 // pred_check
        %p177 = pneg %p176
      $region22: #{tpu_custom_call.1} parent=5 // pred_check_branch
        %179 = sbr.rel (%p177) target = $region24
      $region23: #{tpu_custom_call.1} parent=5 // pred_region
        // Predicated region
        $region25: #{tpu_custom_call.1} parent=23 // pred_check
          %p180 = pneg %p47
        $region26: #{tpu_custom_call.1} parent=23 // pred_check_branch
          %182 = sbr.rel (%p180) target = $region28
        $region27: #{tpu_custom_call.1} parent=23 // pred_region
          %s183 = smul.u32 8, %s21
          %s184 = ssub.s32 9, %s183
          %p185 = scmp.lt.s32.totalorder %s184, 8
          %s186 = scalar_select %p185, %s184, 8
          %s187 = smul.u32 8, %s186
          %s188 = smul.u32 %s187, 2
          %p189 = scmp.lt.s32.totalorder %s20, 1
          %s190 = scalar_select %p189, %s20, 1
          %p191 = scmp.lt.s32.totalorder %s183, 8
          %s192 = scalar_select %p191, %s183, 8
          %s193 = smul.addr %s192, 2
          %s194 = smul.addr %s190, 18
          %s195 = sadd.s32 %s193, %s194
          %s196 = smul.addr %s195, 8
          %s197 = scalar_lea.vmem %s0, %s196
          %s198 = smul.u32 8, %s21
          %s199 = ssub.s32 9, %s198
          %p200 = scmp.lt.s32.totalorder %s199, 8
          %s201 = scalar_select %p200, %s199, 8
          %s202 = smul.u32 8, %s201
          %s203 = smul.u32 %s202, 2
        $region28: #{tpu_custom_call.1} parent=23 // pred_fallthru
          _
        // Predicated region
        $region29: #{tpu_custom_call.1} parent=23 // pred_check
          %p204 = pneg %p79
        $region30: #{tpu_custom_call.1} parent=23 // pred_check_branch
          %206 = sbr.rel (%p204) target = $region32
        $region31: #{tpu_custom_call.1} parent=23 // pred_region
          %s207 = smul.u32 %s21, 8
          %s208 = sadd.s32 %s207, 8
          %p209 = scmp.lt.s32.totalorder %s20, 1
          %s210 = scalar_select %p209, %s20, 1
          %p211 = scmp.lt.s32.totalorder %s208, 8
          %s212 = scalar_select %p211, %s208, 8
          %s213 = smul.addr %s212, 2
          %s214 = smul.addr %s210, 18
          %s215 = sadd.s32 %s213, %s214
          %s216 = smul.addr %s215, 8
          %s217 = scalar_lea.vmem %s1, %s216
          %s218 = smul.u32 %s21, 8
          %s219 = sadd.s32 %s218, 8
        $region32: #{tpu_custom_call.1} parent=23 // pred_fallthru
          _
      $region24: #{tpu_custom_call.1} parent=5 // pred_fallthru
        _
      %p220 = scmp.le.s32.totalorder 1, %s13
      %p221 = scmp.lt.s32.totalorder %s13, 3
      %p222 = pnand %p220, %p221
      %p223 = pneg %p222
      // Predicated region
      $region33: #{tpu_custom_call.1} parent=5 // pred_check
        _
      $region34: #{tpu_custom_call.1} parent=5 // pred_check_branch
        %225 = sbr.rel (%p222) target = $region36
      $region35: #{tpu_custom_call.1} parent=5 // pred_region
        %s226 = ssub.s32 %s13, 1
        %s227 = smul.u32 8, %s23
        %s228 = ssub.s32 9, %s227
        %p229 = scmp.lt.s32.totalorder %s228, 8
        %s230 = scalar_select %p229, %s228, 8
        %s231 = smul.u32 8, %s230
        %s232 = smul.u32 %s231, 2
        %p233 = scmp.lt.s32.totalorder %s22, 1
        %s234 = scalar_select %p233, %s22, 1
        %p235 = scmp.lt.s32.totalorder %s227, 8
        %s236 = scalar_select %p235, %s227, 8
        %s237 = smul.addr %s236, 2
        %s238 = smul.addr %s234, 18
        %s239 = sadd.s32 %s237, %s238
        %s240 = smul.addr %s239, 8
        %s241 = scalar_lea.vmem %s0, %s240
        %p242 = pneg %p53
        %p243 = pneg %p50
        %s244 = smul.u32 %s23, 8
        %s245 = sadd.s32 %s244, 8
        %p246 = scmp.lt.s32.totalorder %s22, 1
        %s247 = scalar_select %p246, %s22, 1
        %p248 = scmp.lt.s32.totalorder %s245, 8
        %s249 = scalar_select %p248, %s245, 8
        %s250 = smul.addr %s249, 2
        %s251 = smul.addr %s247, 18
        %s252 = sadd.s32 %s250, %s251
        %s253 = smul.addr %s252, 8
        %s254 = scalar_lea.vmem %s1, %s253
        %p255 = pneg %p85
        %p256 = pneg %p82
        %p257 = pneg %p106
        %p258 = pneg %p103
        %p259 = pneg %p127
        %p260 = pneg %p124
        %p261 = pneg %p155
        %p262 = pneg %p152
        %s263 = sand.u32 %s142, 1
        %s264 = scalar_lea.sflag [#allocation4], %s263
        %s265 = sand.u32 %s142, 1
        %s266 = smul.addr %s265, 32
        %s267 = scalar_lea.vmem [#allocation3], %s266
        %s268 = smul.u32 8, %s23
        %s269 = ssub.s32 9, %s268
        %p270 = scmp.lt.s32.totalorder %s269, 8
        %s271 = scalar_select %p270, %s269, 8
        %s272 = smul.u32 8, %s271
        %s273 = smul.u32 %s272, 2
        %p274 = scmp.lt.s32.totalorder %s22, 1
        %s275 = scalar_select %p274, %s22, 1
        %p276 = scmp.lt.s32.totalorder %s268, 8
        %s277 = scalar_select %p276, %s268, 8
        %s278 = smul.addr %s277, 2
        %s279 = smul.addr %s275, 18
        %s280 = sadd.s32 %s278, %s279
        %s281 = smul.addr %s280, 8
        %s282 = scalar_lea.vmem %s0, %s281
        %s283 = smul.u32 8, %s23
        %s284 = ssub.s32 9, %s283
        %p285 = scmp.lt.s32.totalorder %s284, 8
        %s286 = scalar_select %p285, %s284, 8
        %s287 = smul.u32 8, %s286
        %s288 = smul.u32 %s287, 2
        %s289 = smul.u32 %s23, 8
        %s290 = sadd.s32 %s289, 8
        %p291 = scmp.lt.s32.totalorder %s22, 1
        %s292 = scalar_select %p291, %s22, 1
        %p293 = scmp.lt.s32.totalorder %s290, 8
        %s294 = scalar_select %p293, %s290, 8
        %s295 = smul.addr %s294, 2
        %s296 = smul.addr %s292, 18
        %s297 = sadd.s32 %s295, %s296
        %s298 = smul.addr %s297, 8
        %s299 = scalar_lea.vmem %s1, %s298
        %s300 = smul.u32 %s23, 8
        %s301 = sadd.s32 %s300, 8
        %v302 = vld [vmem:[%s282] sm:$0xff]
        %v303 = vld [vmem:[%s282 + $0x8] sm:$0x1]
        %v304 = vld [vmem:[%s282 + $0x10] sm:$0xff]
        %v305 = vld [vmem:[%s282 + $0x18] sm:$0x1]
        %v306 = vld [vmem:[%s282 + $0x20] sm:$0xff]
        %v307 = vld [vmem:[%s282 + $0x28] sm:$0x1]
        %v308 = vld [vmem:[%s282 + $0x30] sm:$0xff]
        %v309 = vld [vmem:[%s282 + $0x38] sm:$0x1]
        %v310 = vld [vmem:[%s282 + $0x40] sm:$0xff]
        %v311 = vld [vmem:[%s282 + $0x48] sm:$0x1]
        %v312 = vld [vmem:[%s282 + $0x50] sm:$0xff]
        %v313 = vld [vmem:[%s282 + $0x58] sm:$0x1]
        %v314 = vld [vmem:[%s282 + $0x60] sm:$0xff]
        %v315 = vld [vmem:[%s282 + $0x68] sm:$0x1]
        %v316 = vld [vmem:[%s282 + $0x70] sm:$0xff]
        %v317 = vld [vmem:[%s282 + $0x78] sm:$0x1]
        %vm318 = vcmask 130048
        %319 = vst.msk [vmem:[#allocation2] sm:$0xff] %vm318, %v302
        %vm320 = vcmask 122880
        %321 = vst.msk [vmem:[#allocation2 + $0x8] sm:$0x1] %vm320, %v303
        %322 = vst.msk [vmem:[#allocation2 + $0x10] sm:$0xff] %vm318, %v304
        %323 = vst.msk [vmem:[#allocation2 + $0x18] sm:$0x1] %vm320, %v305
        %324 = vst.msk [vmem:[#allocation2 + $0x20] sm:$0xff] %vm318, %v306
        %325 = vst.msk [vmem:[#allocation2 + $0x28] sm:$0x1] %vm320, %v307
        %326 = vst.msk [vmem:[#allocation2 + $0x30] sm:$0xff] %vm318, %v308
        %327 = vst.msk [vmem:[#allocation2 + $0x38] sm:$0x1] %vm320, %v309
        %328 = vst.msk [vmem:[#allocation2 + $0x40] sm:$0xff] %vm318, %v310
        %329 = vst.msk [vmem:[#allocation2 + $0x48] sm:$0x1] %vm320, %v311
        %330 = vst.msk [vmem:[#allocation2 + $0x50] sm:$0xff] %vm318, %v312
        %331 = vst.msk [vmem:[#allocation2 + $0x58] sm:$0x1] %vm320, %v313
        %332 = vst.msk [vmem:[#allocation2 + $0x60] sm:$0xff] %vm318, %v314
        %333 = vst.msk [vmem:[#allocation2 + $0x68] sm:$0x1] %vm320, %v315
        %334 = vst.msk [vmem:[#allocation2 + $0x70] sm:$0xff] %vm318, %v316
        %335 = vst.msk [vmem:[#allocation2 + $0x78] sm:$0x1] %vm320, %v317
        %v336 = vld [vmem:[%s299] sm:$0xff]
        %v337 = vld [vmem:[%s299 + $0x8] sm:$0x1]
        %s338 = scalar_lea.vmem [#allocation2], 128
        %339 = vst.msk [vmem:[%s338] sm:$0xff] %vm318, %v336
        %340 = vst.msk [vmem:[%s338 + $0x8] sm:$0x1] %vm320, %v337
        %v341 = vld [vmem:[#allocation2] sm:$0xff]
        %v342 = vld [vmem:[#allocation2 + $0x10] sm:$0xff]
        %v343 = vld [vmem:[#allocation2 + $0x20] sm:$0xff]
        %v344 = vld [vmem:[#allocation2 + $0x30] sm:$0xff]
        %v345 = vld [vmem:[#allocation2 + $0x40] sm:$0xff]
        %v346 = vld [vmem:[#allocation2 + $0x50] sm:$0xff]
        %v347 = vld [vmem:[#allocation2 + $0x60] sm:$0xff]
        %v348 = vld [vmem:[#allocation2 + $0x70] sm:$0xff]
        %v349 = vld [vmem:[%s2] sm:$0xff]
        %v350 = vld [vmem:[%s2 + $0x8] sm:$0xff]
        %v351 = vld [vmem:[%s2 + $0x10] sm:$0xff]
        %v352 = vld [vmem:[%s2 + $0x18] sm:$0xff]
        %v353 = vld [vmem:[#allocation2 + $0x1] sm:$0xff]
        %v354 = vld [vmem:[#allocation2 + $0x11] sm:$0xff]
        %v355 = vld [vmem:[#allocation2 + $0x21] sm:$0xff]
        %v356 = vld [vmem:[#allocation2 + $0x31] sm:$0xff]
        %v357 = vld [vmem:[#allocation2 + $0x41] sm:$0xff]
        %v358 = vld [vmem:[#allocation2 + $0x51] sm:$0xff]
        %v359 = vld [vmem:[#allocation2 + $0x61] sm:$0xff]
        %v360 = vld [vmem:[#allocation2 + $0x71] sm:$0xff]
        %s361 = scalar_lea.vmem %s2, 32
        %v362 = vld [vmem:[%s361] sm:$0xff]
        %v363 = vld [vmem:[%s361 + $0x8] sm:$0xff]
        %v364 = vld [vmem:[%s361 + $0x10] sm:$0xff]
        %v365 = vld [vmem:[%s361 + $0x18] sm:$0xff]
        %v367 = vsel %vm318, %v362, 0
        %v370 = vsel %vm318, %v363, 0
        %v373 = vsel %vm318, %v364, 0
        %v376 = vsel %vm318, %v365, 0
        %v379 = vsel %vm318, %v353, 0
        %v382 = vsel %vm318, %v354, 0
        %v385 = vsel %vm318, %v355, 0
        %v388 = vsel %vm318, %v356, 0
        %v391 = vsel %vm318, %v357, 0
        %v394 = vsel %vm318, %v358, 0
        %v397 = vsel %vm318, %v359, 0
        %v400 = vsel %vm318, %v360, 0
        %402 = vmatpush.xpose.msra.mxu0 0.0
        %403 = vmatpush.xpose.msra.mxu0 0.0
        %404 = vmatpush.xpose.msra.mxu0 0.0
        %405 = vmatpush.xpose.msra.mxu0 0.0
        %406 = vmatpush.xpose.msra.mxu0 0.0
        %407 = vmatpush.xpose.msra.mxu0 0.0
        %408 = vmatpush.xpose.msra.mxu0 0.0
        %409 = vmatpush.xpose.msra.mxu0 0.0
        %410 = vmatpush.xpose.msra.mxu0 %v400
        %411 = vmatpush.xpose.msra.mxu0 %v397
        %412 = vmatpush.xpose.msra.mxu0 %v394
        %413 = vmatpush.xpose.msra.mxu0 %v391
        %414 = vmatpush.xpose.msra.mxu0 %v388
        %415 = vmatpush.xpose.msra.mxu0 %v385
        %416 = vmatpush.xpose.msra.mxu0 %v382
        %417 = vmatpush.xpose.msra.mxu0 %v379
        %418 = vmatmul.f32.gmra.mxu0 %v367
        %v419 = vpop.f32.mrf.mxu0
        %v420 = vadd.f32 0.0, %v419
        %421 = vmatmul.f32.gmra.mxu0 %v370
        %v422 = vpop.f32.mrf.mxu0
        %v423 = vadd.f32 0.0, %v422
        %424 = vmatmul.f32.gmra.mxu0 %v373
        %v425 = vpop.f32.mrf.mxu0
        %v426 = vadd.f32 0.0, %v425
        %427 = vmatmul.f32.gmra.mxu0 %v376
        %v428 = vpop.f32.mrf.mxu0
        %v429 = vadd.f32 0.0, %v428
        %430 = vdwg.mxu0
        %v432 = vsel %vm318, %v349, 0
        %v435 = vsel %vm318, %v350, 0
        %v438 = vsel %vm318, %v351, 0
        %v441 = vsel %vm318, %v352, 0
        %v444 = vsel %vm318, %v341, 0
        %v447 = vsel %vm318, %v342, 0
        %v450 = vsel %vm318, %v343, 0
        %v453 = vsel %vm318, %v344, 0
        %v456 = vsel %vm318, %v345, 0
        %v459 = vsel %vm318, %v346, 0
        %v462 = vsel %vm318, %v347, 0
        %v465 = vsel %vm318, %v348, 0
        %467 = vmatpush.xpose.msra.mxu0 0.0
        %468 = vmatpush.xpose.msra.mxu0 0.0
        %469 = vmatpush.xpose.msra.mxu0 0.0
        %470 = vmatpush.xpose.msra.mxu0 0.0
        %471 = vmatpush.xpose.msra.mxu0 0.0
        %472 = vmatpush.xpose.msra.mxu0 0.0
        %473 = vmatpush.xpose.msra.mxu0 0.0
        %474 = vmatpush.xpose.msra.mxu0 0.0
        %475 = vmatpush.xpose.msra.mxu0 %v465
        %476 = vmatpush.xpose.msra.mxu0 %v462
        %477 = vmatpush.xpose.msra.mxu0 %v459
        %478 = vmatpush.xpose.msra.mxu0 %v456
        %479 = vmatpush.xpose.msra.mxu0 %v453
        %480 = vmatpush.xpose.msra.mxu0 %v450
        %481 = vmatpush.xpose.msra.mxu0 %v447
        %482 = vmatpush.xpose.msra.mxu0 %v444
        %483 = vmatmul.f32.gmra.mxu0 %v432
        %v484 = vpop.f32.mrf.mxu0
        %v485 = vadd.f32 %v420, %v484
        %486 = vmatmul.f32.gmra.mxu0 %v435
        %v487 = vpop.f32.mrf.mxu0
        %v488 = vadd.f32 %v423, %v487
        %489 = vmatmul.f32.gmra.mxu0 %v438
        %v490 = vpop.f32.mrf.mxu0
        %v491 = vadd.f32 %v426, %v490
        %492 = vmatmul.f32.gmra.mxu0 %v441
        %v493 = vpop.f32.mrf.mxu0
        %v494 = vadd.f32 %v429, %v493
        %495 = vdwg.mxu0
        %s496 = scalar_lea.vmem [#allocation2], 16
        %v497 = vld [vmem:[%s496] sm:$0xff]
        %v498 = vld [vmem:[%s496 + $0x10] sm:$0xff]
        %v499 = vld [vmem:[%s496 + $0x20] sm:$0xff]
        %v500 = vld [vmem:[%s496 + $0x30] sm:$0xff]
        %v501 = vld [vmem:[%s496 + $0x40] sm:$0xff]
        %v502 = vld [vmem:[%s496 + $0x50] sm:$0xff]
        %v503 = vld [vmem:[%s496 + $0x60] sm:$0xff]
        %v504 = vld [vmem:[%s496 + $0x70] sm:$0xff]
        %s505 = scalar_lea.vmem %s2, 64
        %v506 = vld [vmem:[%s505] sm:$0xff]
        %v507 = vld [vmem:[%s505 + $0x8] sm:$0xff]
        %v508 = vld [vmem:[%s505 + $0x10] sm:$0xff]
        %v509 = vld [vmem:[%s505 + $0x18] sm:$0xff]
        %v511 = vsel %vm318, %v506, 0
        %v514 = vsel %vm318, %v507, 0
        %v517 = vsel %vm318, %v508, 0
        %v520 = vsel %vm318, %v509, 0
        %v523 = vsel %vm318, %v497, 0
        %v526 = vsel %vm318, %v498, 0
        %v529 = vsel %vm318, %v499, 0
        %v532 = vsel %vm318, %v500, 0
        %v535 = vsel %vm318, %v501, 0
        %v538 = vsel %vm318, %v502, 0
        %v541 = vsel %vm318, %v503, 0
        %v544 = vsel %vm318, %v504, 0
        %546 = vmatpush.xpose.msra.mxu0 0.0
        %547 = vmatpush.xpose.msra.mxu0 0.0
        %548 = vmatpush.xpose.msra.mxu0 0.0
        %549 = vmatpush.xpose.msra.mxu0 0.0
        %550 = vmatpush.xpose.msra.mxu0 0.0
        %551 = vmatpush.xpose.msra.mxu0 0.0
        %552 = vmatpush.xpose.msra.mxu0 0.0
        %553 = vmatpush.xpose.msra.mxu0 0.0
        %554 = vmatpush.xpose.msra.mxu0 %v544
        %555 = vmatpush.xpose.msra.mxu0 %v541
        %556 = vmatpush.xpose.msra.mxu0 %v538
        %557 = vmatpush.xpose.msra.mxu0 %v535
        %558 = vmatpush.xpose.msra.mxu0 %v532
        %559 = vmatpush.xpose.msra.mxu0 %v529
        %560 = vmatpush.xpose.msra.mxu0 %v526
        %561 = vmatpush.xpose.msra.mxu0 %v523
        %562 = vmatmul.f32.gmra.mxu0 %v511
        %v563 = vpop.f32.mrf.mxu0
        %v564 = vadd.f32 0.0, %v563
        %565 = vmatmul.f32.gmra.mxu0 %v514
        %v566 = vpop.f32.mrf.mxu0
        %v567 = vadd.f32 0.0, %v566
        %568 = vmatmul.f32.gmra.mxu0 %v517
        %v569 = vpop.f32.mrf.mxu0
        %v570 = vadd.f32 0.0, %v569
        %571 = vmatmul.f32.gmra.mxu0 %v520
        %v572 = vpop.f32.mrf.mxu0
        %v573 = vadd.f32 0.0, %v572
        %574 = vdwg.mxu0
        %v575 = vadd.f32 %v485, %v564
        %v576 = vadd.f32 %v488, %v567
        %v577 = vadd.f32 %v491, %v570
        %v578 = vadd.f32 %v494, %v573
        %v579 = vld [vmem:[%s496 + $0x1] sm:$0xff]
        %v580 = vld [vmem:[%s496 + $0x11] sm:$0xff]
        %v581 = vld [vmem:[%s496 + $0x21] sm:$0xff]
        %v582 = vld [vmem:[%s496 + $0x31] sm:$0xff]
        %v583 = vld [vmem:[%s496 + $0x41] sm:$0xff]
        %v584 = vld [vmem:[%s496 + $0x51] sm:$0xff]
        %v585 = vld [vmem:[%s496 + $0x61] sm:$0xff]
        %v586 = vld [vmem:[%s496 + $0x71] sm:$0xff]
        %s587 = scalar_lea.vmem %s2, 96
        %v588 = vld [vmem:[%s587] sm:$0xff]
        %v589 = vld [vmem:[%s587 + $0x8] sm:$0xff]
        %v590 = vld [vmem:[%s587 + $0x10] sm:$0xff]
        %v591 = vld [vmem:[%s587 + $0x18] sm:$0xff]
        %v593 = vsel %vm318, %v588, 0
        %v596 = vsel %vm318, %v589, 0
        %v599 = vsel %vm318, %v590, 0
        %v602 = vsel %vm318, %v591, 0
        %v605 = vsel %vm318, %v579, 0
        %v608 = vsel %vm318, %v580, 0
        %v611 = vsel %vm318, %v581, 0
        %v614 = vsel %vm318, %v582, 0
        %v617 = vsel %vm318, %v583, 0
        %v620 = vsel %vm318, %v584, 0
        %v623 = vsel %vm318, %v585, 0
        %v626 = vsel %vm318, %v586, 0
        %628 = vmatpush.xpose.msra.mxu0 0.0
        %629 = vmatpush.xpose.msra.mxu0 0.0
        %630 = vmatpush.xpose.msra.mxu0 0.0
        %631 = vmatpush.xpose.msra.mxu0 0.0
        %632 = vmatpush.xpose.msra.mxu0 0.0
        %633 = vmatpush.xpose.msra.mxu0 0.0
        %634 = vmatpush.xpose.msra.mxu0 0.0
        %635 = vmatpush.xpose.msra.mxu0 0.0
        %636 = vmatpush.xpose.msra.mxu0 %v626
        %637 = vmatpush.xpose.msra.mxu0 %v623
        %638 = vmatpush.xpose.msra.mxu0 %v620
        %639 = vmatpush.xpose.msra.mxu0 %v617
        %640 = vmatpush.xpose.msra.mxu0 %v614
        %641 = vmatpush.xpose.msra.mxu0 %v611
        %642 = vmatpush.xpose.msra.mxu0 %v608
        %643 = vmatpush.xpose.msra.mxu0 %v605
        %644 = vmatmul.f32.gmra.mxu0 %v593
        %v645 = vpop.f32.mrf.mxu0
        %v646 = vadd.f32 0.0, %v645
        %647 = vmatmul.f32.gmra.mxu0 %v596
        %v648 = vpop.f32.mrf.mxu0
        %v649 = vadd.f32 0.0, %v648
        %650 = vmatmul.f32.gmra.mxu0 %v599
        %v651 = vpop.f32.mrf.mxu0
        %v652 = vadd.f32 0.0, %v651
        %653 = vmatmul.f32.gmra.mxu0 %v602
        %v654 = vpop.f32.mrf.mxu0
        %v655 = vadd.f32 0.0, %v654
        %656 = vdwg.mxu0
        %v657 = vadd.f32 %v575, %v646
        %v658 = vadd.f32 %v576, %v649
        %v659 = vadd.f32 %v577, %v652
        %v660 = vadd.f32 %v578, %v655
        %v661 = vld [vmem:[%s3] sm:$0xff]
        %v662 = vld [vmem:[%s3 + $0x8] sm:$0xff]
        %v663 = vld [vmem:[%s3 + $0x10] sm:$0xff]
        %v664 = vld [vmem:[%s3 + $0x18] sm:$0xff]
        %666 = vset.pattern.permute.xlu0 0
        %667 = vperm.xlu0 %666, %v661
        %v668 = vpop.permute.xlu0 %667
        %671 = vset.pattern.permute.xlu0 0
        %672 = vperm.xlu0 %671, %v662
        %v673 = vpop.permute.xlu0 %672
        %676 = vset.pattern.permute.xlu0 0
        %677 = vperm.xlu0 %676, %v663
        %v678 = vpop.permute.xlu0 %677
        %681 = vset.pattern.permute.xlu0 0
        %682 = vperm.xlu0 %681, %v664
        %v683 = vpop.permute.xlu0 %682
        %v685 = vadd.f32 %v657, %v668
        %v686 = vadd.f32 %v658, %v673
        %v687 = vadd.f32 %v659, %v678
        %v688 = vadd.f32 %v660, %v683
        %v689 = vmax.f32 %v685, 0.0
        %v690 = vmax.f32 %v686, 0.0
        %v691 = vmax.f32 %v687, 0.0
        %v692 = vmax.f32 %v688, 0.0
        %vm693 = vcmask 523264
        %694 = vst.msk [vmem:[%s267] sm:$0xff] %vm693, %v689
        %695 = vst.msk [vmem:[%s267 + $0x8] sm:$0xff] %vm693, %v690
        %696 = vst.msk [vmem:[%s267 + $0x10] sm:$0xff] %vm693, %v691
        %697 = vst.msk [vmem:[%s267 + $0x18] sm:$0xff] %vm693, %v692
        %s698 = sand.u32 %s142, 1
        %s699 = scalar_lea.sflag [#allocation4], %s698
        %s700 = sand.u32 %s142, 1
        %s701 = smul.addr %s700, 32
        %s702 = scalar_lea.vmem [#allocation3], %s701
        // Predicated region
        $region37: #{tpu_custom_call.1} parent=35 // pred_check
          %p703 = pneg %p152
        $region38: #{tpu_custom_call.1} parent=35 // pred_check_branch
          %705 = sbr.rel (%p703) target = $region40
        $region39: #{tpu_custom_call.1} parent=35 // pred_region
          %707 = vsyncadd %s699, 0
          %s708 = smul.addr %s22, 4
          %s709 = sadd.s32 %s23, %s708
          %s710 = smul.addr %s709, 8
          %s711 = scalar_lea.hbm %s4, %s710
          %s712 = sshll.u32 %s702, 4
          %s713 = int_to_ptr.vmem [resolvable:$true] %s712
          %s714 = sshll.u32 %s711, 4
          %s715 = int_to_ptr.hbm [resolvable:$true] %s714
          %720 = dma.vmem_to_hbm [thread:$0]  %s713, 512, %s715, %s699, 128, 128, 8
        $region40: #{tpu_custom_call.1} parent=35 // pred_fallthru
          _
      $region36: #{tpu_custom_call.1} parent=5 // pred_fallthru
        _
      %p721 = scmp.le.s32.totalorder 2, %s13
      // Predicated region
      $region41: #{tpu_custom_call.1} parent=5 // pred_check
        %p722 = pneg %p721
      $region42: #{tpu_custom_call.1} parent=5 // pred_check_branch
        %724 = sbr.rel (%p722) target = $region44
      $region43: #{tpu_custom_call.1} parent=5 // pred_region
        %s725 = ssub.s32 %s13, 2
        // Predicated region
        $region45: #{tpu_custom_call.1} parent=43 // pred_check
          %p726 = pneg %p158
        $region46: #{tpu_custom_call.1} parent=43 // pred_check_branch
          %728 = sbr.rel (%p726) target = $region48
        $region47: #{tpu_custom_call.1} parent=43 // pred_region
          %s729 = sand.u32 %s143, 1
          %s730 = scalar_lea.sflag [#allocation4], %s729
          %s731 = sand.u32 %s143, 1
          %s732 = smul.addr %s731, 32
          %s733 = scalar_lea.vmem [#allocation3], %s732
          %735 = dma.done %s730, 512
        $region48: #{tpu_custom_call.1} parent=43 // pred_fallthru
          _
      $region44: #{tpu_custom_call.1} parent=5 // pred_fallthru
        _
    $region6: #{tpu_custom_call.1} parent=1 // loop_footer
      %s17 = sadd.s32 1, %s13
    $region7: #{tpu_custom_call.1} parent=1 // loop_footer_branch
      %12 = sbr.rel target = $region3
    $region8: #{tpu_custom_call.1} parent=1 // loop_exit
      _
    %736 = vsyncpa [#allocation4], 1
    %s737 = scalar_lea.sflag [#allocation4], 1
    %738 = vsyncpa %s737, 1

</llo_original>
